<compile_context>
chip_gen: v5e
topology: v5e:2x2
jax: 0.10.0
libtpu: 0.0.40
codegen_flags: <defaults>
</compile_context>

<pallas_src>
import jax
import jax.numpy as jnp
from jax.experimental import pallas as pl
from jax.experimental.pallas import tpu as pltpu


def _mlp_kernel(xp_ref, w1_ref, b1_ref, w2_ref, b2_ref, w3_ref, b3_ref, o_ref):
    # xp_ref: (tr, P*feat) packed, lane-dense.  Weights are block-diagonal packed.
    x = xp_ref[...].astype(w1_ref.dtype)                                  # cast in-kernel (free)
    h1 = jnp.dot(x, w1_ref[...], preferred_element_type=jnp.float32)      # (tr, P*mid) f32
    h1 = jnp.maximum(h1 + b1_ref[...], 0.0)
    h2 = jnp.dot(h1.astype(w2_ref.dtype), w2_ref[...],
                 preferred_element_type=jnp.float32)                      # (tr, P*mid) f32
    h2 = jnp.maximum(h2 + b2_ref[...], 0.0)
    out = jnp.dot(h2, w3_ref[...], preferred_element_type=jnp.float32)    # (tr, P) f32
    o_ref[...] = (out + b3_ref[...]).astype(o_ref.dtype)


def _round_up(a, m):
    return -(-a // m) * m


def density_decoder_forward(features, params, *, tm=32768,
                            compute_dtype=jnp.float32,
                            vmem_limit_bytes=48 * 1024 * 1024):
    """features: (..., feat_dim) -> (..., 1) float32.

    params: (w1, b1, w2, b2, w3, b3) in PyTorch layout (w: (out, in), b: (out,)).
    tm = sample rows per grid step (big tiles amortize per-step pipeline overhead).
    compute_dtype=jnp.bfloat16 runs the two big matmuls in bf16 (f32 accumulation);
    for the full HBM-read halving, supply `features` already in bf16 from the producer.
    """
    w1, b1, w2, b2, w3, b3 = params
    feat_dim = w1.shape[1]
    middle = w1.shape[0]
    lead = features.shape[:-1]

    x = features.reshape(-1, feat_dim)          # no dtype cast here (would be an extra HBM pass)
    M = x.shape[0]

    # --- packing factor: P consecutive samples per lane-dense 128-wide row ---
    P = 128 // feat_dim if (feat_dim <= 128 and 128 % feat_dim == 0) else 1

    # Minimal pad (<= P-1 rows) so the packing reshape is a pure row-major re-view.
    rpad = (-M) % P
    if rpad:
        x = jnp.pad(x, ((0, rpad), (0, 0)))
    Mp = M + rpad
    R = Mp // P
    xp = x.reshape(R, P * feat_dim)             # free row-major reshape -> lane-dense rows

    # --- block-diagonal packed weights (tiny; built once per call) ---
    eyeP = jnp.eye(P, dtype=jnp.float32)
    w1p = jnp.kron(eyeP, w1.T.astype(jnp.float32)).astype(compute_dtype)   # (P*feat, P*mid)
    w2p = jnp.kron(eyeP, w2.T.astype(jnp.float32)).astype(compute_dtype)   # (P*mid, P*mid)
    w3p = jnp.kron(eyeP, w3.T.astype(jnp.float32))                         # (P*mid, P) f32
    b1p = jnp.tile(b1.astype(jnp.float32), (P,)).reshape(1, P * middle)
    b2p = jnp.tile(b2.astype(jnp.float32), (P,)).reshape(1, P * middle)
    b3p = jnp.tile(b3.astype(jnp.float32).reshape(1), (P,)).reshape(1, P)

    # --- tile selection (packed rows per step) ---
    x_item = jnp.dtype(x.dtype).itemsize
    sub = 16 if x_item == 2 else 8
    tr = _round_up(max(1, int(tm) // P), sub)
    # keep >= 2 (balanced-ish) grid steps when there is enough work, so both v7x TCs are fed
    if R >= 2 * sub:
        tr = min(tr, _round_up(pl.cdiv(R, 2), sub))
    # VMEM budget cap: x double-buffer + f32 h1/h2 intermediates + output double-buffer
    per_row_bytes = 2 * P * feat_dim * x_item + 2 * P * middle * 4 + 2 * P * 4
    tr = min(tr, max(sub, ((int(0.6 * vmem_limit_bytes) // per_row_bytes) // sub) * sub))
    tr = min(tr, _round_up(R, sub))
    grid_m = pl.cdiv(R, tr)                     # partial last block; no full-array padding

    flops = int(2 * Mp * (feat_dim * middle + middle * middle + middle))
    bytes_accessed = int(
        Mp * feat_dim * x_item + Mp * 4
        + (w1p.size + w2p.size) * jnp.dtype(compute_dtype).itemsize
        + (w3p.size + b1p.size + b2p.size + b3p.size) * 4)

    out = pl.pallas_call(
        _mlp_kernel,
        out_shape=jax.ShapeDtypeStruct((R, P), jnp.float32),
        grid_spec=pltpu.PrefetchScalarGridSpec(
            num_scalar_prefetch=0,
            grid=(grid_m,),
            in_specs=[
                pl.BlockSpec((tr, P * feat_dim), lambda i: (i, 0)),       # packed x tile
                pl.BlockSpec((P * feat_dim, P * middle), lambda i: (0, 0)),  # W1 packed
                pl.BlockSpec((1, P * middle), lambda i: (0, 0)),          # b1 packed
                pl.BlockSpec((P * middle, P * middle), lambda i: (0, 0)), # W2 packed
                pl.BlockSpec((1, P * middle), lambda i: (0, 0)),          # b2 packed
                pl.BlockSpec((P * middle, P), lambda i: (0, 0)),          # W3 packed
                pl.BlockSpec((1, P), lambda i: (0, 0)),                   # b3 packed
            ],
            out_specs=pl.BlockSpec((tr, P), lambda i: (i, 0)),            # packed output
        ),
        compiler_params=pltpu.CompilerParams(
            dimension_semantics=("parallel",),
            vmem_limit_bytes=int(vmem_limit_bytes)),
        cost_estimate=pl.CostEstimate(
            flops=flops, transcendentals=0, bytes_accessed=bytes_accessed),
    )(xp, w1p, b1p, w2p, b2p, w3p, b3p)

    # Packed (R, P) rows flatten row-major back to sample order; drop the <=P-1 pad rows.
    out = out.reshape(-1)[:M]
    return out.reshape(*lead, 1)


def init_density_decoder_params(key, feat_dim, middle_dim=32):
    """torch.nn.Linear default init (uniform +/- 1/sqrt(fan_in)), PyTorch (out, in) layout.
    Final-layer bias is zero-initialized, matching torch.nn.init.constant_(layer3.bias, 0)."""
    k1, k2, k3, k4, k5 = jax.random.split(key, 5)

    def lin(kw, kb, fan_in, fan_out):
        bound = float(fan_in) ** -0.5
        w = jax.random.uniform(kw, (fan_out, fan_in), jnp.float32, -bound, bound)
        b = jax.random.uniform(kb, (fan_out,), jnp.float32, -bound, bound)
        return w, b

    w1, b1 = lin(k1, k2, feat_dim, middle_dim)
    w2, b2 = lin(k3, k4, middle_dim, middle_dim)
    w3, _ = lin(k5, k5, middle_dim, 1)
    b3 = jnp.zeros((1,), jnp.float32)
    return (w1, b1, w2, b2, w3, b3)


def _reference(features, params):
    w1, b1, w2, b2, w3, b3 = params
    p = jax.lax.Precision.HIGHEST
    h = jnp.maximum(jnp.einsum("...i,oi->...o", features, w1, precision=p) + b1, 0.0)
    h = jnp.maximum(jnp.einsum("...i,oi->...o", h, w2, precision=p) + b2, 0.0)
    return jnp.einsum("...i,oi->...o", h, w3, precision=p) + b3


if __name__ == "__main__":
    key = jax.random.PRNGKey(0)
    feat_dim, middle_dim = 16, 32
    batch, npts = 2, 600  # features: (2, 600, 16) -> 1200 rows

    kx, kp = jax.random.split(key)
    features = jax.random.normal(kx, (batch, npts, feat_dim), jnp.float32)
    params = init_density_decoder_params(kp, feat_dim, middle_dim)
    ref = _reference(features, params)

    # Default (large-tile) f32 path: grid is cdiv-split with a partial last block.
    density = jax.block_until_ready(density_decoder_forward(features, params))
    assert density.shape == (batch, npts, 1), density.shape
    assert jnp.allclose(density, ref, atol=1e-4, rtol=1e-4), "f32 mismatch vs reference"

    # Smaller tile: multi-step parallel grid + partial last block.
    density2 = jax.block_until_ready(density_decoder_forward(features, params, tm=512))
    assert jnp.allclose(density2, ref, atol=1e-4, rtol=1e-4), "tiled mismatch vs reference"

    # Row count not divisible by the packing factor (exercises the minimal tail pad + slice).
    feats_odd = jax.random.normal(kx, (batch, 601, feat_dim), jnp.float32)
    ref_odd = _reference(feats_odd, params)
    density_odd = jax.block_until_ready(density_decoder_forward(feats_odd, params))
    assert density_odd.shape == (batch, 601, 1)
    assert jnp.allclose(density_odd, ref_odd, atol=1e-4, rtol=1e-4), "odd-row mismatch"

    # bf16 weight path (f32 accumulation); supply bf16 features for the full HBM-read win.
    density3 = jax.block_until_ready(
        density_decoder_forward(features, params, compute_dtype=jnp.bfloat16))
    assert density3.shape == (batch, npts, 1)
    assert float(jnp.max(jnp.abs(density3 - ref))) < 0.1, "bf16 path diverged"

    print("KERNEL_OK")
</pallas_src>

<mosaic_0001>
module attributes {stable_mosaic.version = 11 : i64} {
  func.func @_mlp_kernel(%arg0: i32, %arg1: memref<80x128xf32, #tpu.memory_space<vmem>>, %arg2: memref<128x256xf32, #tpu.memory_space<vmem>>, %arg3: memref<1x256xf32, #tpu.memory_space<vmem>>, %arg4: memref<256x256xf32, #tpu.memory_space<vmem>>, %arg5: memref<1x256xf32, #tpu.memory_space<vmem>>, %arg6: memref<256x8xf32, #tpu.memory_space<vmem>>, %arg7: memref<1x8xf32, #tpu.memory_space<vmem>>, %arg8: memref<80x8xf32, #tpu.memory_space<vmem>>) attributes {dimension_semantics = [#tpu.dimension_semantics<parallel>], iteration_bounds = array<i64: 2>, scalar_prefetch = 0 : i64, scratch_operands = 0 : i64, tpu.core_type = #tpu.core_type<tc>, window_params = [{transform_indices = @transform_0, window_bounds = array<i64: 80, 128>}, {pipeline_mode = #tpu.pipeline_mode<synchronous>, transform_indices = @transform_1, window_bounds = array<i64: 128, 256>}, {pipeline_mode = #tpu.pipeline_mode<synchronous>, transform_indices = @transform_2, window_bounds = array<i64: 1, 256>}, {pipeline_mode = #tpu.pipeline_mode<synchronous>, transform_indices = @transform_3, window_bounds = array<i64: 256, 256>}, {pipeline_mode = #tpu.pipeline_mode<synchronous>, transform_indices = @transform_4, window_bounds = array<i64: 1, 256>}, {pipeline_mode = #tpu.pipeline_mode<synchronous>, transform_indices = @transform_5, window_bounds = array<i64: 256, 8>}, {pipeline_mode = #tpu.pipeline_mode<synchronous>, transform_indices = @transform_6, window_bounds = array<i64: 1, 8>}, {transform_indices = @transform_7, window_bounds = array<i64: 80, 8>}]} {
    %c0 = arith.constant 0 : index
    %c0_0 = arith.constant 0 : index
    %0 = vector.load %arg1[%c0, %c0_0] : memref<80x128xf32, #tpu.memory_space<vmem>>, vector<80x128xf32>
    %c0_1 = arith.constant 0 : index
    %c0_2 = arith.constant 0 : index
    %1 = vector.load %arg2[%c0_1, %c0_2] : memref<128x256xf32, #tpu.memory_space<vmem>>, vector<128x256xf32>
    %cst = arith.constant dense<0.000000e+00> : vector<80x256xf32>
    %2 = tpu.matmul %0, %1, %cst {dimension_numbers = #tpu.dot_dimension_numbers<[1], [0], [0], [1], [0, 0, 1, 1], [], []>} : vector<80x128xf32>, vector<128x256xf32>, vector<80x256xf32> -> vector<80x256xf32>
    %c0_3 = arith.constant 0 : index
    %c0_4 = arith.constant 0 : index
    %3 = vector.load %arg3[%c0_3, %c0_4] : memref<1x256xf32, #tpu.memory_space<vmem>>, vector<1x256xf32>
    %4 = vector.broadcast %3 : vector<1x256xf32> to vector<80x256xf32>
    %5 = arith.addf %2, %4 : vector<80x256xf32>
    %cst_5 = arith.constant 0.000000e+00 : f32
    %6 = vector.broadcast %cst_5 : f32 to vector<80x256xf32>
    %7 = arith.maximumf %5, %6 : vector<80x256xf32>
    %c0_6 = arith.constant 0 : index
    %c0_7 = arith.constant 0 : index
    %8 = vector.load %arg4[%c0_6, %c0_7] : memref<256x256xf32, #tpu.memory_space<vmem>>, vector<256x256xf32>
    %cst_8 = arith.constant dense<0.000000e+00> : vector<80x256xf32>
    %9 = tpu.matmul %7, %8, %cst_8 {dimension_numbers = #tpu.dot_dimension_numbers<[1], [0], [0], [1], [0, 0, 1, 1], [], []>} : vector<80x256xf32>, vector<256x256xf32>, vector<80x256xf32> -> vector<80x256xf32>
    %c0_9 = arith.constant 0 : index
    %c0_10 = arith.constant 0 : index
    %10 = vector.load %arg5[%c0_9, %c0_10] : memref<1x256xf32, #tpu.memory_space<vmem>>, vector<1x256xf32>
    %11 = vector.broadcast %10 : vector<1x256xf32> to vector<80x256xf32>
    %12 = arith.addf %9, %11 : vector<80x256xf32>
    %cst_11 = arith.constant 0.000000e+00 : f32
    %13 = vector.broadcast %cst_11 : f32 to vector<80x256xf32>
    %14 = arith.maximumf %12, %13 : vector<80x256xf32>
    %c0_12 = arith.constant 0 : index
    %c0_13 = arith.constant 0 : index
    %15 = vector.load %arg6[%c0_12, %c0_13] : memref<256x8xf32, #tpu.memory_space<vmem>>, vector<256x8xf32>
    %cst_14 = arith.constant dense<0.000000e+00> : vector<80x8xf32>
    %16 = tpu.matmul %14, %15, %cst_14 {dimension_numbers = #tpu.dot_dimension_numbers<[1], [0], [0], [1], [0, 0, 1, 1], [], []>} : vector<80x256xf32>, vector<256x8xf32>, vector<80x8xf32> -> vector<80x8xf32>
    %c0_15 = arith.constant 0 : index
    %c0_16 = arith.constant 0 : index
    %17 = vector.load %arg7[%c0_15, %c0_16] : memref<1x8xf32, #tpu.memory_space<vmem>>, vector<1x8xf32>
    %18 = vector.broadcast %17 : vector<1x8xf32> to vector<80x8xf32>
    %19 = arith.addf %16, %18 : vector<80x8xf32>
    %c0_17 = arith.constant 0 : index
    %c0_18 = arith.constant 0 : index
    %20 = vector.load %arg8[%c0_17, %c0_18] : memref<80x8xf32, #tpu.memory_space<vmem>>, vector<80x8xf32>
    tpu.vector_store %arg8[%c0_17, %c0_18], %19 {strides = array<i32>} : memref<80x8xf32, #tpu.memory_space<vmem>>, vector<80x8xf32>,
    return
  }
  func.func @transform_0(%arg0: i32) -> (i32, i32) {
    %c0_i32 = arith.constant 0 : i32
    %c0_i32_0 = arith.constant 0 : i32
    return %arg0, %c0_i32 : i32, i32
  }
  func.func @transform_1(%arg0: i32) -> (i32, i32) {
    %c0_i32 = arith.constant 0 : i32
    %c0_i32_0 = arith.constant 0 : i32
    %c0_i32_1 = arith.constant 0 : i32
    return %c0_i32, %c0_i32_0 : i32, i32
  }
  func.func @transform_2(%arg0: i32) -> (i32, i32) {
    %c0_i32 = arith.constant 0 : i32
    %c0_i32_0 = arith.constant 0 : i32
    %c0_i32_1 = arith.constant 0 : i32
    return %c0_i32, %c0_i32_0 : i32, i32
  }
  func.func @transform_3(%arg0: i32) -> (i32, i32) {
    %c0_i32 = arith.constant 0 : i32
    %c0_i32_0 = arith.constant 0 : i32
    %c0_i32_1 = arith.constant 0 : i32
    return %c0_i32, %c0_i32_0 : i32, i32
  }
  func.func @transform_4(%arg0: i32) -> (i32, i32) {
    %c0_i32 = arith.constant 0 : i32
    %c0_i32_0 = arith.constant 0 : i32
    %c0_i32_1 = arith.constant 0 : i32
    return %c0_i32, %c0_i32_0 : i32, i32
  }
  func.func @transform_5(%arg0: i32) -> (i32, i32) {
    %c0_i32 = arith.constant 0 : i32
    %c0_i32_0 = arith.constant 0 : i32
    %c0_i32_1 = arith.constant 0 : i32
    return %c0_i32, %c0_i32_0 : i32, i32
  }
  func.func @transform_6(%arg0: i32) -> (i32, i32) {
    %c0_i32 = arith.constant 0 : i32
    %c0_i32_0 = arith.constant 0 : i32
    %c0_i32_1 = arith.constant 0 : i32
    return %c0_i32, %c0_i32_0 : i32, i32
  }
  func.func @transform_7(%arg0: i32) -> (i32, i32) {
    %c0_i32 = arith.constant 0 : i32
    %c0_i32_0 = arith.constant 0 : i32
    return %arg0, %c0_i32 : i32, i32
  }
}

</mosaic_0001>

<llo_original>
// kernel: tpu_custom_call.1
$region0: #{tpu_custom_call.1}
  #allocation0 [shape = 'u32[]', space=smem, size = 0x4, offset = 0x4, fixed_abs, tag = 'smem constant byte address 0x4 - core index']
  #allocation1 [shape = 'u32[72,128]{1,0:T(1,128)}', space=vmem, size = 0x9000, scoped, tag = 'internal scratch']
  %s0 = inlined_call_operand.hbm [shape: f32[150,128], index: 0, kind: input, shape index: {}]
  %s1 = inlined_call_operand.vmem [shape: f32[128,256], index: 1, kind: input, shape index: {}]
  %s2 = inlined_call_operand.vmem [shape: f32[1,256], index: 2, kind: input, shape index: {}]
  %s3 = inlined_call_operand.hbm [shape: f32[256,256], index: 3, kind: input, shape index: {}]
  %s4 = inlined_call_operand.vmem [shape: f32[1,256], index: 4, kind: input, shape index: {}]
  %s5 = inlined_call_operand.vmem [shape: f32[256,8], index: 5, kind: input, shape index: {}]
  %s6 = inlined_call_operand.vmem [shape: f32[1,8], index: 6, kind: input, shape index: {}]
  %s7 = inlined_call_operand.vmem [shape: f32[150,8], index: 7, kind: output, shape index: {}]
  %s8 = sld [smem:[#allocation0]]
  $region117: #{tpu_custom_call.1} parent=0
    _
  %s10 = ssub.s32 1, %s8
  %s11 = scalar_select 0, %s10, %s8
  $region1: #{tpu_custom_call.1} parent=0
    #allocation2 [shape = 'u8[81920]{0}', space=vmem, size = 0x14000, scoped, tag = 'input window, operand 0']
    #allocation3 [shape = 's32[2]{0}', space=sflag, size = 0x8, scoped, tag = 'scoped memory for tpu_custom_call.1']
    #allocation4 [shape = 'u8[262144]{0}', space=vmem, size = 0x40000, scoped, tag = 'input window, operand 3, single buffered']
    #allocation5 [shape = 's32[1]{0}', space=sflag, size = 0x4, scoped, tag = 'scoped memory for tpu_custom_call.1']
    #allocation6 [shape = 'u8[81920]{0}', space=vmem, size = 0x14000, scoped, tag = 'output window, operand 0']
    %12 = vsyncpa [#allocation3], 0
    %s13 = scalar_lea.sflag [#allocation3], 1
    %14 = vsyncpa %s13, 0
    %15 = vsyncpa [#allocation5], 0
    loop: start=0, step=1, limit=4
    $region2: #{tpu_custom_call.1} parent=1 // loop_pre_header
      _
    $region3: #{tpu_custom_call.1} parent=1 // loop_header
      %s17 = sphi 0, %s21
      %p18 = scmp.ge.s32.totalorder %s17, 4
      %s27 = sphi 0, %s29
      %s30 = sphi 0, %s27
      %s31 = sphi 0, %s30
      %s47 = sphi 0, %s31
      %s51 = sphi 0, %s51
      %s53 = sphi 0, %s51
      %s54 = sphi 0, %s53
      %s68 = sphi 0, %s54
      %s72 = sphi 0, %s72
      %s74 = sphi 0, %s72
      %s75 = sphi 0, %s74
      %s89 = sphi 0, %s75
      %s93 = sphi 0, %s93
      %s95 = sphi 0, %s93
      %s96 = sphi 0, %s95
      %s110 = sphi 0, %s96
      %s114 = sphi 0, %s114
      %s116 = sphi 0, %s114
      %s117 = sphi 0, %s116
      %s131 = sphi 0, %s117
      %s135 = sphi 0, %s135
      %s137 = sphi 0, %s135
      %s138 = sphi 0, %s137
      %s152 = sphi 0, %s138
      %s156 = sphi 0, %s156
      %s158 = sphi 0, %s156
      %s159 = sphi 0, %s158
      %s173 = sphi 0, %s159
      %s179 = sphi 0, %s181
      %s182 = sphi 0, %s179
      %s183 = sphi 0, %s182
      %s199 = sphi 0, %s183
    $region4: #{tpu_custom_call.1} parent=1 // loop_header_branch
      %20 = sbr.rel (%p18) target = $region8
    $region5: #{tpu_custom_call.1} parent=1 // loop_body
      %s22 = ssub.s32 %s17, 1
      %s23 = ssub.s32 %s17, 2
      %s24 = sadd.s32 %s17, 1
      %s25 = ssub.s32 %s17, %s24
      %p26 = scmp.eq.s32.totalorder %s25, 0
      %s28 = sadd.s32 %s27, 1
      %s29 = scalar_select %p26, %s27, %s28
      %p32 = pneg %p26
      %p33 = scmp.eq.s32.totalorder %s17, 1
      %p34 = por %p32, %p33
      %p35 = scmp.ne.s32.totalorder %s27, %s30
      %p36 = scmp.eq.s32.totalorder %s17, 0
      %p37 = por %p35, %p36
      %p38 = scmp.ne.s32.totalorder %s27, %s30
      %p39 = scmp.eq.s32.totalorder %s22, 1
      %p40 = por %p38, %p39
      %p41 = scmp.ne.s32.totalorder %s30, %s31
      %p42 = scmp.eq.s32.totalorder %s22, 0
      %p43 = por %p41, %p42
      %p44 = scmp.ne.s32.totalorder %s30, %s31
      %p45 = scmp.eq.s32.totalorder %s23, 1
      %p46 = por %p44, %p45
      %p48 = scmp.ne.s32.totalorder %s31, %s47
      %p49 = scmp.eq.s32.totalorder %s23, 0
      %p50 = por %p48, %p49
      %s52 = sadd.s32 %s51, 1
      %p55 = scmp.eq.s32.totalorder %s17, 1
      %p56 = scmp.ne.s32.totalorder %s51, %s53
      %p57 = scmp.eq.s32.totalorder %s17, 0
      %p58 = por %p56, %p57
      %p59 = scmp.ne.s32.totalorder %s51, %s53
      %p60 = scmp.eq.s32.totalorder %s22, 1
      %p61 = por %p59, %p60
      %p62 = scmp.ne.s32.totalorder %s53, %s54
      %p63 = scmp.eq.s32.totalorder %s22, 0
      %p64 = por %p62, %p63
      %p65 = scmp.ne.s32.totalorder %s53, %s54
      %p66 = scmp.eq.s32.totalorder %s23, 1
      %p67 = por %p65, %p66
      %p69 = scmp.ne.s32.totalorder %s54, %s68
      %p70 = scmp.eq.s32.totalorder %s23, 0
      %p71 = por %p69, %p70
      %s73 = sadd.s32 %s72, 1
      %p76 = scmp.eq.s32.totalorder %s17, 1
      %p77 = scmp.ne.s32.totalorder %s72, %s74
      %p78 = scmp.eq.s32.totalorder %s17, 0
      %p79 = por %p77, %p78
      %p80 = scmp.ne.s32.totalorder %s72, %s74
      %p81 = scmp.eq.s32.totalorder %s22, 1
      %p82 = por %p80, %p81
      %p83 = scmp.ne.s32.totalorder %s74, %s75
      %p84 = scmp.eq.s32.totalorder %s22, 0
      %p85 = por %p83, %p84
      %p86 = scmp.ne.s32.totalorder %s74, %s75
      %p87 = scmp.eq.s32.totalorder %s23, 1
      %p88 = por %p86, %p87
      %p90 = scmp.ne.s32.totalorder %s75, %s89
      %p91 = scmp.eq.s32.totalorder %s23, 0
      %p92 = por %p90, %p91
      %s94 = sadd.s32 %s93, 1
      %p97 = scmp.eq.s32.totalorder %s17, 1
      %p98 = scmp.ne.s32.totalorder %s93, %s95
      %p99 = scmp.eq.s32.totalorder %s17, 0
      %p100 = por %p98, %p99
      %p101 = scmp.ne.s32.totalorder %s93, %s95
      %p102 = scmp.eq.s32.totalorder %s22, 1
      %p103 = por %p101, %p102
      %p104 = scmp.ne.s32.totalorder %s95, %s96
      %p105 = scmp.eq.s32.totalorder %s22, 0
      %p106 = por %p104, %p105
      %p107 = scmp.ne.s32.totalorder %s95, %s96
      %p108 = scmp.eq.s32.totalorder %s23, 1
      %p109 = por %p107, %p108
      %p111 = scmp.ne.s32.totalorder %s96, %s110
      %p112 = scmp.eq.s32.totalorder %s23, 0
      %p113 = por %p111, %p112
      %s115 = sadd.s32 %s114, 1
      %p118 = scmp.eq.s32.totalorder %s17, 1
      %p119 = scmp.ne.s32.totalorder %s114, %s116
      %p120 = scmp.eq.s32.totalorder %s17, 0
      %p121 = por %p119, %p120
      %p122 = scmp.ne.s32.totalorder %s114, %s116
      %p123 = scmp.eq.s32.totalorder %s22, 1
      %p124 = por %p122, %p123
      %p125 = scmp.ne.s32.totalorder %s116, %s117
      %p126 = scmp.eq.s32.totalorder %s22, 0
      %p127 = por %p125, %p126
      %p128 = scmp.ne.s32.totalorder %s116, %s117
      %p129 = scmp.eq.s32.totalorder %s23, 1
      %p130 = por %p128, %p129
      %p132 = scmp.ne.s32.totalorder %s117, %s131
      %p133 = scmp.eq.s32.totalorder %s23, 0
      %p134 = por %p132, %p133
      %s136 = sadd.s32 %s135, 1
      %p139 = scmp.eq.s32.totalorder %s17, 1
      %p140 = scmp.ne.s32.totalorder %s135, %s137
      %p141 = scmp.eq.s32.totalorder %s17, 0
      %p142 = por %p140, %p141
      %p143 = scmp.ne.s32.totalorder %s135, %s137
      %p144 = scmp.eq.s32.totalorder %s22, 1
      %p145 = por %p143, %p144
      %p146 = scmp.ne.s32.totalorder %s137, %s138
      %p147 = scmp.eq.s32.totalorder %s22, 0
      %p148 = por %p146, %p147
      %p149 = scmp.ne.s32.totalorder %s137, %s138
      %p150 = scmp.eq.s32.totalorder %s23, 1
      %p151 = por %p149, %p150
      %p153 = scmp.ne.s32.totalorder %s138, %s152
      %p154 = scmp.eq.s32.totalorder %s23, 0
      %p155 = por %p153, %p154
      %s157 = sadd.s32 %s156, 1
      %p160 = scmp.eq.s32.totalorder %s17, 1
      %p161 = scmp.ne.s32.totalorder %s156, %s158
      %p162 = scmp.eq.s32.totalorder %s17, 0
      %p163 = por %p161, %p162
      %p164 = scmp.ne.s32.totalorder %s156, %s158
      %p165 = scmp.eq.s32.totalorder %s22, 1
      %p166 = por %p164, %p165
      %p167 = scmp.ne.s32.totalorder %s158, %s159
      %p168 = scmp.eq.s32.totalorder %s22, 0
      %p169 = por %p167, %p168
      %p170 = scmp.ne.s32.totalorder %s158, %s159
      %p171 = scmp.eq.s32.totalorder %s23, 1
      %p172 = por %p170, %p171
      %p174 = scmp.ne.s32.totalorder %s159, %s173
      %p175 = scmp.eq.s32.totalorder %s23, 0
      %p176 = por %p174, %p175
      %s177 = ssub.s32 %s17, %s24
      %p178 = scmp.eq.s32.totalorder %s177, 0
      %s180 = sadd.s32 %s179, 1
      %s181 = scalar_select %p178, %s179, %s180
      %p184 = pneg %p178
      %p185 = scmp.eq.s32.totalorder %s17, 1
      %p186 = por %p184, %p185
      %p187 = scmp.ne.s32.totalorder %s179, %s182
      %p188 = scmp.eq.s32.totalorder %s17, 0
      %p189 = por %p187, %p188
      %p190 = scmp.ne.s32.totalorder %s179, %s182
      %p191 = scmp.eq.s32.totalorder %s22, 1
      %p192 = por %p190, %p191
      %p193 = scmp.ne.s32.totalorder %s182, %s183
      %p194 = scmp.eq.s32.totalorder %s22, 0
      %p195 = por %p193, %p194
      %p196 = scmp.ne.s32.totalorder %s182, %s183
      %p197 = scmp.eq.s32.totalorder %s23, 1
      %p198 = por %p196, %p197
      %p200 = scmp.ne.s32.totalorder %s183, %s199
      %p201 = scmp.eq.s32.totalorder %s23, 0
      %p202 = por %p200, %p201
      %p203 = scmp.le.s32.totalorder 1, %s17
      %p204 = scmp.lt.s32.totalorder %s17, 3
      %p205 = pnand %p203, %p204
      %p206 = pneg %p205
      // Predicated region
      $region9: #{tpu_custom_call.1} parent=5 // pred_check
        _
      $region10: #{tpu_custom_call.1} parent=5 // pred_check_branch
        %208 = sbr.rel (%p205) target = $region12
      $region11: #{tpu_custom_call.1} parent=5 // pred_region
        %s209 = ssub.s32 %s17, 1
        // Predicated region
        $region13: #{tpu_custom_call.1} parent=11 // pred_check
          %p210 = pneg %p64
        $region14: #{tpu_custom_call.1} parent=11 // pred_check_branch
          %212 = sbr.rel (%p210) target = $region16
        $region15: #{tpu_custom_call.1} parent=11 // pred_region
          _
        $region16: #{tpu_custom_call.1} parent=11 // pred_fallthru
          _
        // Predicated region
        $region17: #{tpu_custom_call.1} parent=11 // pred_check
          %p213 = pneg %p85
        $region18: #{tpu_custom_call.1} parent=11 // pred_check_branch
          %215 = sbr.rel (%p213) target = $region20
        $region19: #{tpu_custom_call.1} parent=11 // pred_region
          _
        $region20: #{tpu_custom_call.1} parent=11 // pred_fallthru
          _
        // Predicated region
        $region21: #{tpu_custom_call.1} parent=11 // pred_check
          %p216 = pneg %p106
        $region22: #{tpu_custom_call.1} parent=11 // pred_check_branch
          %218 = sbr.rel (%p216) target = $region24
        $region23: #{tpu_custom_call.1} parent=11 // pred_region
          %220 = vsyncadd [#allocation5], 0
          %s221 = sshll.u32 %s3, 4
          %s222 = int_to_ptr.hbm [resolvable:$true] %s221
          %s223 = sshll.u32 [#allocation4], 4
          %s224 = int_to_ptr.vmem [resolvable:$true] %s223
          %229 = dma.hbm_to_vmem [thread:$0]  %s222, 8192, %s224, [#allocation5], 256, 256, 16
        $region24: #{tpu_custom_call.1} parent=11 // pred_fallthru
          _
        // Predicated region
        $region25: #{tpu_custom_call.1} parent=11 // pred_check
          %p230 = pneg %p127
        $region26: #{tpu_custom_call.1} parent=11 // pred_check_branch
          %232 = sbr.rel (%p230) target = $region28
        $region27: #{tpu_custom_call.1} parent=11 // pred_region
          _
        $region28: #{tpu_custom_call.1} parent=11 // pred_fallthru
          _
        // Predicated region
        $region29: #{tpu_custom_call.1} parent=11 // pred_check
          %p233 = pneg %p148
        $region30: #{tpu_custom_call.1} parent=11 // pred_check_branch
          %235 = sbr.rel (%p233) target = $region32
        $region31: #{tpu_custom_call.1} parent=11 // pred_region
          _
        $region32: #{tpu_custom_call.1} parent=11 // pred_fallthru
          _
        // Predicated region
        $region33: #{tpu_custom_call.1} parent=11 // pred_check
          %p236 = pneg %p169
        $region34: #{tpu_custom_call.1} parent=11 // pred_check_branch
          %238 = sbr.rel (%p236) target = $region36
        $region35: #{tpu_custom_call.1} parent=11 // pred_region
          _
        $region36: #{tpu_custom_call.1} parent=11 // pred_fallthru
          _
      $region12: #{tpu_custom_call.1} parent=5 // pred_fallthru
        _
      %p239 = scmp.lt.s32.totalorder %s17, 2
      // Predicated region
      $region37: #{tpu_custom_call.1} parent=5 // pred_check
        %p240 = pneg %p239
      $region38: #{tpu_custom_call.1} parent=5 // pred_check_branch
        %242 = sbr.rel (%p240) target = $region40
      $region39: #{tpu_custom_call.1} parent=5 // pred_region
        // Predicated region
        $region41: #{tpu_custom_call.1} parent=39 // pred_check
          %p243 = pneg %p37
        $region42: #{tpu_custom_call.1} parent=39 // pred_check_branch
          %245 = sbr.rel (%p243) target = $region44
        $region43: #{tpu_custom_call.1} parent=39 // pred_region
          %s246 = sand.u32 %s27, 1
          %s247 = scalar_lea.sflag [#allocation3], %s246
          %s248 = sand.u32 %s27, 1
          %s249 = smul.addr %s248, 80
          %s250 = scalar_lea.vmem [#allocation2], %s249
          %s251 = smul.u32 10, %s17
          %s252 = ssub.s32 19, %s251
          %p253 = scmp.lt.s32.totalorder %s252, 10
          %s254 = scalar_select %p253, %s252, 10
          %s255 = smul.u32 8, %s254
          %s256 = ssub.s32 80, %s255
          %s257 = sshll.u32 %s256, 4
          %258 = vsyncadd %s247, %s257
          %p259 = scmp.ne.s32.totalorder 0, %s255
          %s260 = smul.addr %s251, 8
          %s261 = scalar_lea.hbm %s0, %s260
          %s262 = smul.u32 8, %s254
          %s263 = sshll.u32 %s261, 4
          %s264 = int_to_ptr.hbm [resolvable:$true] %s263
          %s265 = sshll.u32 %s250, 4
          %s266 = int_to_ptr.vmem [resolvable:$true] %s265
          %s267 = sshll.u32 %s262, 4
          %271 = dma.hbm_to_vmem [thread:$0]  (%p259), %s264, %s267, %s266, %s247, 128, 128, 8
        $region44: #{tpu_custom_call.1} parent=39 // pred_fallthru
          _
      $region40: #{tpu_custom_call.1} parent=5 // pred_fallthru
        _
      %p272 = scmp.le.s32.totalorder 1, %s17
      %p273 = scmp.lt.s32.totalorder %s17, 3
      %p274 = pnand %p272, %p273
      %p275 = pneg %p274
      // Predicated region
      $region45: #{tpu_custom_call.1} parent=5 // pred_check
        _
      $region46: #{tpu_custom_call.1} parent=5 // pred_check_branch
        %277 = sbr.rel (%p274) target = $region48
      $region47: #{tpu_custom_call.1} parent=5 // pred_region
        %s278 = ssub.s32 %s17, 1
        %s279 = sand.u32 %s30, 1
        %s280 = scalar_lea.sflag [#allocation3], %s279
        %s281 = sand.u32 %s30, 1
        %s282 = smul.addr %s281, 80
        %s283 = scalar_lea.vmem [#allocation2], %s282
        // Predicated region
        $region49: #{tpu_custom_call.1} parent=47 // pred_check
          %p284 = pneg %p43
        $region50: #{tpu_custom_call.1} parent=47 // pred_check_branch
          %286 = sbr.rel (%p284) target = $region52
        $region51: #{tpu_custom_call.1} parent=47 // pred_region
          %288 = dma.done %s280, 1280
        $region52: #{tpu_custom_call.1} parent=47 // pred_fallthru
          _
        // Predicated region
        $region53: #{tpu_custom_call.1} parent=47 // pred_check
          %p289 = pneg %p106
        $region54: #{tpu_custom_call.1} parent=47 // pred_check_branch
          %291 = sbr.rel (%p289) target = $region56
        $region55: #{tpu_custom_call.1} parent=47 // pred_region
          %293 = dma.done [#allocation5], 8192
        $region56: #{tpu_custom_call.1} parent=47 // pred_fallthru
          _
        %s294 = sand.u32 %s30, 1
        %s295 = scalar_lea.sflag [#allocation3], %s294
        %s296 = sand.u32 %s30, 1
        %s297 = smul.addr %s296, 80
        %s298 = scalar_lea.vmem [#allocation2], %s297
        %p299 = pneg %p43
        %p300 = pneg %p40
        %p301 = pneg %p64
        %p302 = pneg %p61
        %p303 = pneg %p85
        %p304 = pneg %p82
        %p305 = pneg %p106
        %p306 = pneg %p103
        %p307 = pneg %p127
        %p308 = pneg %p124
        %p309 = pneg %p148
        %p310 = pneg %p145
        %p311 = pneg %p169
        %p312 = pneg %p166
        %p313 = pneg %p195
        %p314 = pneg %p192
        %s315 = sand.u32 %s182, 1
        %s316 = sand.u32 %s182, 1
        %s317 = smul.addr %s316, 80
        %s318 = scalar_lea.vmem [#allocation6], %s317
        %s319 = smul.u32 10, %s22
        %s320 = ssub.s32 19, %s319
        %p321 = scmp.lt.s32.totalorder %s320, 10
        %s322 = scalar_select %p321, %s320, 10
        %s323 = smul.u32 8, %s322
        %s324 = smul.u32 10, %s22
        %s325 = ssub.s32 19, %s324
        %p326 = scmp.lt.s32.totalorder %s325, 10
        %s327 = scalar_select %p326, %s325, 10
        %s328 = smul.u32 8, %s327
        %v329 = vld [vmem:[%s283] sm:$0xff]
        %v330 = vld [vmem:[%s283 + $0x8] sm:$0xff]
        %v331 = vld [vmem:[%s283 + $0x10] sm:$0xff]
        %v332 = vld [vmem:[%s283 + $0x18] sm:$0xff]
        %v333 = vld [vmem:[%s283 + $0x20] sm:$0xff]
        %v334 = vld [vmem:[%s283 + $0x28] sm:$0xff]
        %v335 = vld [vmem:[%s283 + $0x30] sm:$0xff]
        %v336 = vld [vmem:[%s283 + $0x38] sm:$0xff]
        %v337 = vld [vmem:[%s283 + $0x40] sm:$0xff]
        %v338 = vld [vmem:[%s283 + $0x48] sm:$0xff]
        %v339 = vld [vmem:[%s1] sm:$0xff]
        %v340 = vld [vmem:[%s1 + $0x8] sm:$0xff]
        %v341 = vld [vmem:[%s1 + $0x10] sm:$0xff]
        %v342 = vld [vmem:[%s1 + $0x18] sm:$0xff]
        %v343 = vld [vmem:[%s1 + $0x20] sm:$0xff]
        %v344 = vld [vmem:[%s1 + $0x28] sm:$0xff]
        %v345 = vld [vmem:[%s1 + $0x30] sm:$0xff]
        %v346 = vld [vmem:[%s1 + $0x38] sm:$0xff]
        %v347 = vld [vmem:[%s1 + $0x40] sm:$0xff]
        %v348 = vld [vmem:[%s1 + $0x48] sm:$0xff]
        %v349 = vld [vmem:[%s1 + $0x50] sm:$0xff]
        %v350 = vld [vmem:[%s1 + $0x58] sm:$0xff]
        %v351 = vld [vmem:[%s1 + $0x60] sm:$0xff]
        %v352 = vld [vmem:[%s1 + $0x68] sm:$0xff]
        %v353 = vld [vmem:[%s1 + $0x70] sm:$0xff]
        %v354 = vld [vmem:[%s1 + $0x78] sm:$0xff]
        %v355 = vld [vmem:[%s1 + $0x80] sm:$0xff]
        %v356 = vld [vmem:[%s1 + $0x88] sm:$0xff]
        %v357 = vld [vmem:[%s1 + $0x90] sm:$0xff]
        %v358 = vld [vmem:[%s1 + $0x98] sm:$0xff]
        %v359 = vld [vmem:[%s1 + $0xa0] sm:$0xff]
        %v360 = vld [vmem:[%s1 + $0xa8] sm:$0xff]
        %v361 = vld [vmem:[%s1 + $0xb0] sm:$0xff]
        %v362 = vld [vmem:[%s1 + $0xb8] sm:$0xff]
        %v363 = vld [vmem:[%s1 + $0xc0] sm:$0xff]
        %v364 = vld [vmem:[%s1 + $0xc8] sm:$0xff]
        %v365 = vld [vmem:[%s1 + $0xd0] sm:$0xff]
        %v366 = vld [vmem:[%s1 + $0xd8] sm:$0xff]
        %v367 = vld [vmem:[%s1 + $0xe0] sm:$0xff]
        %v368 = vld [vmem:[%s1 + $0xe8] sm:$0xff]
        %v369 = vld [vmem:[%s1 + $0xf0] sm:$0xff]
        %v370 = vld [vmem:[%s1 + $0xf8] sm:$0xff]
        %v371 = vld [vmem:[%s2] sm:$0x3]
        %v373 = vperm.slane %v371, 0
        %v374 = vperm.slane %v371, 1
        %377 = vmatpush.msra.mxu0 %v369
        %378 = vmatpush.msra.mxu0 %v367
        %379 = vmatpush.msra.mxu0 %v365
        %380 = vmatpush.msra.mxu0 %v363
        %381 = vmatpush.msra.mxu0 %v361
        %382 = vmatpush.msra.mxu0 %v359
        %383 = vmatpush.msra.mxu0 %v357
        %384 = vmatpush.msra.mxu0 %v355
        %385 = vmatpush.msra.mxu0 %v353
        %386 = vmatpush.msra.mxu0 %v351
        %387 = vmatpush.msra.mxu0 %v349
        %388 = vmatpush.msra.mxu0 %v347
        %389 = vmatpush.msra.mxu0 %v345
        %390 = vmatpush.msra.mxu0 %v343
        %391 = vmatpush.msra.mxu0 %v341
        %392 = vmatpush.msra.mxu0 %v339
        %393 = vmatmul.f32.gmra.mxu0 %v329
        %v394 = vpop.f32.mrf.mxu0
        %v395 = vadd.f32 %v373, %v394
        %396 = vmatmul.f32.gmra.mxu0 %v330
        %v397 = vpop.f32.mrf.mxu0
        %v398 = vadd.f32 %v373, %v397
        %399 = vmatmul.f32.gmra.mxu0 %v331
        %v400 = vpop.f32.mrf.mxu0
        %v401 = vadd.f32 %v373, %v400
        %402 = vmatmul.f32.gmra.mxu0 %v332
        %v403 = vpop.f32.mrf.mxu0
        %v404 = vadd.f32 %v373, %v403
        %405 = vmatmul.f32.gmra.mxu0 %v333
        %v406 = vpop.f32.mrf.mxu0
        %v407 = vadd.f32 %v373, %v406
        %408 = vmatmul.f32.gmra.mxu0 %v334
        %v409 = vpop.f32.mrf.mxu0
        %v410 = vadd.f32 %v373, %v409
        %411 = vmatmul.f32.gmra.mxu0 %v335
        %v412 = vpop.f32.mrf.mxu0
        %v413 = vadd.f32 %v373, %v412
        %414 = vmatmul.f32.gmra.mxu0 %v336
        %v415 = vpop.f32.mrf.mxu0
        %v416 = vadd.f32 %v373, %v415
        %417 = vmatmul.f32.gmra.mxu0 %v337
        %v418 = vpop.f32.mrf.mxu0
        %v419 = vadd.f32 %v373, %v418
        %420 = vmatmul.f32.gmra.mxu0 %v338
        %v421 = vpop.f32.mrf.mxu0
        %v422 = vadd.f32 %v373, %v421
        %423 = vdwg.mxu0
        %424 = vmatpush.msra.mxu0 %v370
        %425 = vmatpush.msra.mxu0 %v368
        %426 = vmatpush.msra.mxu0 %v366
        %427 = vmatpush.msra.mxu0 %v364
        %428 = vmatpush.msra.mxu0 %v362
        %429 = vmatpush.msra.mxu0 %v360
        %430 = vmatpush.msra.mxu0 %v358
        %431 = vmatpush.msra.mxu0 %v356
        %432 = vmatpush.msra.mxu0 %v354
        %433 = vmatpush.msra.mxu0 %v352
        %434 = vmatpush.msra.mxu0 %v350
        %435 = vmatpush.msra.mxu0 %v348
        %436 = vmatpush.msra.mxu0 %v346
        %437 = vmatpush.msra.mxu0 %v344
        %438 = vmatpush.msra.mxu0 %v342
        %439 = vmatpush.msra.mxu0 %v340
        %440 = vmatmul.f32.gmra.mxu0 %v329
        %v441 = vpop.f32.mrf.mxu0
        %v442 = vadd.f32 %v374, %v441
        %443 = vmatmul.f32.gmra.mxu0 %v330
        %v444 = vpop.f32.mrf.mxu0
        %v445 = vadd.f32 %v374, %v444
        %446 = vmatmul.f32.gmra.mxu0 %v331
        %v447 = vpop.f32.mrf.mxu0
        %v448 = vadd.f32 %v374, %v447
        %449 = vmatmul.f32.gmra.mxu0 %v332
        %v450 = vpop.f32.mrf.mxu0
        %v451 = vadd.f32 %v374, %v450
        %452 = vmatmul.f32.gmra.mxu0 %v333
        %v453 = vpop.f32.mrf.mxu0
        %v454 = vadd.f32 %v374, %v453
        %455 = vmatmul.f32.gmra.mxu0 %v334
        %v456 = vpop.f32.mrf.mxu0
        %v457 = vadd.f32 %v374, %v456
        %458 = vmatmul.f32.gmra.mxu0 %v335
        %v459 = vpop.f32.mrf.mxu0
        %v460 = vadd.f32 %v374, %v459
        %461 = vmatmul.f32.gmra.mxu0 %v336
        %v462 = vpop.f32.mrf.mxu0
        %v463 = vadd.f32 %v374, %v462
        %464 = vmatmul.f32.gmra.mxu0 %v337
        %v465 = vpop.f32.mrf.mxu0
        %v466 = vadd.f32 %v374, %v465
        %467 = vmatmul.f32.gmra.mxu0 %v338
        %v468 = vpop.f32.mrf.mxu0
        %v469 = vadd.f32 %v374, %v468
        %470 = vdwg.mxu0
        %v471 = vmax.f32 %v395, 0.0
        %v472 = vmax.f32 %v442, 0.0
        %v473 = vmax.f32 %v398, 0.0
        %v474 = vmax.f32 %v445, 0.0
        %v475 = vmax.f32 %v401, 0.0
        %v476 = vmax.f32 %v448, 0.0
        %v477 = vmax.f32 %v404, 0.0
        %v478 = vmax.f32 %v451, 0.0
        %v479 = vmax.f32 %v407, 0.0
        %v480 = vmax.f32 %v454, 0.0
        %v481 = vmax.f32 %v410, 0.0
        %v482 = vmax.f32 %v457, 0.0
        %v483 = vmax.f32 %v413, 0.0
        %v484 = vmax.f32 %v460, 0.0
        %v485 = vmax.f32 %v416, 0.0
        %v486 = vmax.f32 %v463, 0.0
        %v487 = vmax.f32 %v419, 0.0
        %v488 = vmax.f32 %v466, 0.0
        %v489 = vmax.f32 %v422, 0.0
        %v490 = vmax.f32 %v469, 0.0
        %v491 = vld [vmem:[#allocation4] sm:$0xff]
        %v492 = vld [vmem:[#allocation4 + $0x8] sm:$0xff]
        %v493 = vld [vmem:[#allocation4 + $0x10] sm:$0xff]
        %v494 = vld [vmem:[#allocation4 + $0x18] sm:$0xff]
        %v495 = vld [vmem:[#allocation4 + $0x20] sm:$0xff]
        %v496 = vld [vmem:[#allocation4 + $0x28] sm:$0xff]
        %v497 = vld [vmem:[#allocation4 + $0x30] sm:$0xff]
        %v498 = vld [vmem:[#allocation4 + $0x38] sm:$0xff]
        %v499 = vld [vmem:[#allocation4 + $0x40] sm:$0xff]
        %v500 = vld [vmem:[#allocation4 + $0x48] sm:$0xff]
        %v501 = vld [vmem:[#allocation4 + $0x50] sm:$0xff]
        %v502 = vld [vmem:[#allocation4 + $0x58] sm:$0xff]
        %v503 = vld [vmem:[#allocation4 + $0x60] sm:$0xff]
        %v504 = vld [vmem:[#allocation4 + $0x68] sm:$0xff]
        %v505 = vld [vmem:[#allocation4 + $0x70] sm:$0xff]
        %v506 = vld [vmem:[#allocation4 + $0x78] sm:$0xff]
        %v507 = vld [vmem:[#allocation4 + $0x80] sm:$0xff]
        %v508 = vld [vmem:[#allocation4 + $0x88] sm:$0xff]
        %v509 = vld [vmem:[#allocation4 + $0x90] sm:$0xff]
        %v510 = vld [vmem:[#allocation4 + $0x98] sm:$0xff]
        %v511 = vld [vmem:[#allocation4 + $0xa0] sm:$0xff]
        %v512 = vld [vmem:[#allocation4 + $0xa8] sm:$0xff]
        %v513 = vld [vmem:[#allocation4 + $0xb0] sm:$0xff]
        %v514 = vld [vmem:[#allocation4 + $0xb8] sm:$0xff]
        %v515 = vld [vmem:[#allocation4 + $0xc0] sm:$0xff]
        %v516 = vld [vmem:[#allocation4 + $0xc8] sm:$0xff]
        %v517 = vld [vmem:[#allocation4 + $0xd0] sm:$0xff]
        %v518 = vld [vmem:[#allocation4 + $0xd8] sm:$0xff]
        %v519 = vld [vmem:[#allocation4 + $0xe0] sm:$0xff]
        %v520 = vld [vmem:[#allocation4 + $0xe8] sm:$0xff]
        %v521 = vld [vmem:[#allocation4 + $0xf0] sm:$0xff]
        %v522 = vld [vmem:[#allocation4 + $0xf8] sm:$0xff]
        %v523 = vld [vmem:[#allocation4 + $0x100] sm:$0xff]
        %v524 = vld [vmem:[#allocation4 + $0x108] sm:$0xff]
        %v525 = vld [vmem:[#allocation4 + $0x110] sm:$0xff]
        %v526 = vld [vmem:[#allocation4 + $0x118] sm:$0xff]
        %v527 = vld [vmem:[#allocation4 + $0x120] sm:$0xff]
        %v528 = vld [vmem:[#allocation4 + $0x128] sm:$0xff]
        %v529 = vld [vmem:[#allocation4 + $0x130] sm:$0xff]
        %v530 = vld [vmem:[#allocation4 + $0x138] sm:$0xff]
        %v531 = vld [vmem:[#allocation4 + $0x140] sm:$0xff]
        %v532 = vld [vmem:[#allocation4 + $0x148] sm:$0xff]
        %v533 = vld [vmem:[#allocation4 + $0x150] sm:$0xff]
        %v534 = vld [vmem:[#allocation4 + $0x158] sm:$0xff]
        %v535 = vld [vmem:[#allocation4 + $0x160] sm:$0xff]
        %v536 = vld [vmem:[#allocation4 + $0x168] sm:$0xff]
        %v537 = vld [vmem:[#allocation4 + $0x170] sm:$0xff]
        %v538 = vld [vmem:[#allocation4 + $0x178] sm:$0xff]
        %v539 = vld [vmem:[#allocation4 + $0x180] sm:$0xff]
        %v540 = vld [vmem:[#allocation4 + $0x188] sm:$0xff]
        %v541 = vld [vmem:[#allocation4 + $0x190] sm:$0xff]
        %v542 = vld [vmem:[#allocation4 + $0x198] sm:$0xff]
        %v543 = vld [vmem:[#allocation4 + $0x1a0] sm:$0xff]
        %v544 = vld [vmem:[#allocation4 + $0x1a8] sm:$0xff]
        %v545 = vld [vmem:[#allocation4 + $0x1b0] sm:$0xff]
        %v546 = vld [vmem:[#allocation4 + $0x1b8] sm:$0xff]
        %v547 = vld [vmem:[#allocation4 + $0x1c0] sm:$0xff]
        %v548 = vld [vmem:[#allocation4 + $0x1c8] sm:$0xff]
        %v549 = vld [vmem:[#allocation4 + $0x1d0] sm:$0xff]
        %v550 = vld [vmem:[#allocation4 + $0x1d8] sm:$0xff]
        %v551 = vld [vmem:[#allocation4 + $0x1e0] sm:$0xff]
        %v552 = vld [vmem:[#allocation4 + $0x1e8] sm:$0xff]
        %v553 = vld [vmem:[#allocation4 + $0x1f0] sm:$0xff]
        %v554 = vld [vmem:[#allocation4 + $0x1f8] sm:$0xff]
        %v555 = vld [vmem:[%s4] sm:$0x3]
        %v557 = vperm.slane %v555, 0
        %v558 = vperm.slane %v555, 1
        %561 = vmatpush.msra.mxu0 %v521
        %562 = vmatpush.msra.mxu0 %v519
        %563 = vmatpush.msra.mxu0 %v517
        %564 = vmatpush.msra.mxu0 %v515
        %565 = vmatpush.msra.mxu0 %v513
        %566 = vmatpush.msra.mxu0 %v511
        %567 = vmatpush.msra.mxu0 %v509
        %568 = vmatpush.msra.mxu0 %v507
        %569 = vmatpush.msra.mxu0 %v505
        %570 = vmatpush.msra.mxu0 %v503
        %571 = vmatpush.msra.mxu0 %v501
        %572 = vmatpush.msra.mxu0 %v499
        %573 = vmatpush.msra.mxu0 %v497
        %574 = vmatpush.msra.mxu0 %v495
        %575 = vmatpush.msra.mxu0 %v493
        %576 = vmatpush.msra.mxu0 %v491
        %577 = vmatmul.f32.gmra.mxu0 %v471
        %v578 = vpop.f32.mrf.mxu0
        %v579 = vadd.f32 %v557, %v578
        %580 = vmatmul.f32.gmra.mxu0 %v473
        %v581 = vpop.f32.mrf.mxu0
        %v582 = vadd.f32 %v557, %v581
        %583 = vmatmul.f32.gmra.mxu0 %v475
        %v584 = vpop.f32.mrf.mxu0
        %v585 = vadd.f32 %v557, %v584
        %586 = vmatmul.f32.gmra.mxu0 %v477
        %v587 = vpop.f32.mrf.mxu0
        %v588 = vadd.f32 %v557, %v587
        %589 = vmatmul.f32.gmra.mxu0 %v479
        %v590 = vpop.f32.mrf.mxu0
        %v591 = vadd.f32 %v557, %v590
        %592 = vmatmul.f32.gmra.mxu0 %v481
        %v593 = vpop.f32.mrf.mxu0
        %v594 = vadd.f32 %v557, %v593
        %595 = vmatmul.f32.gmra.mxu0 %v483
        %v596 = vpop.f32.mrf.mxu0
        %v597 = vadd.f32 %v557, %v596
        %598 = vmatmul.f32.gmra.mxu0 %v485
        %v599 = vpop.f32.mrf.mxu0
        %v600 = vadd.f32 %v557, %v599
        %601 = vmatmul.f32.gmra.mxu0 %v487
        %v602 = vpop.f32.mrf.mxu0
        %v603 = vadd.f32 %v557, %v602
        %604 = vmatmul.f32.gmra.mxu0 %v489
        %v605 = vpop.f32.mrf.mxu0
        %v606 = vadd.f32 %v557, %v605
        %607 = vdwg.mxu0
        %608 = vmatpush.msra.mxu0 %v553
        %609 = vmatpush.msra.mxu0 %v551
        %610 = vmatpush.msra.mxu0 %v549
        %611 = vmatpush.msra.mxu0 %v547
        %612 = vmatpush.msra.mxu0 %v545
        %613 = vmatpush.msra.mxu0 %v543
        %614 = vmatpush.msra.mxu0 %v541
        %615 = vmatpush.msra.mxu0 %v539
        %616 = vmatpush.msra.mxu0 %v537
        %617 = vmatpush.msra.mxu0 %v535
        %618 = vmatpush.msra.mxu0 %v533
        %619 = vmatpush.msra.mxu0 %v531
        %620 = vmatpush.msra.mxu0 %v529
        %621 = vmatpush.msra.mxu0 %v527
        %622 = vmatpush.msra.mxu0 %v525
        %623 = vmatpush.msra.mxu0 %v523
        %624 = vmatmul.f32.gmra.mxu0 %v472
        %v625 = vpop.f32.mrf.mxu0
        %v626 = vadd.f32 %v579, %v625
        %627 = vmatmul.f32.gmra.mxu0 %v474
        %v628 = vpop.f32.mrf.mxu0
        %v629 = vadd.f32 %v582, %v628
        %630 = vmatmul.f32.gmra.mxu0 %v476
        %v631 = vpop.f32.mrf.mxu0
        %v632 = vadd.f32 %v585, %v631
        %633 = vmatmul.f32.gmra.mxu0 %v478
        %v634 = vpop.f32.mrf.mxu0
        %v635 = vadd.f32 %v588, %v634
        %636 = vmatmul.f32.gmra.mxu0 %v480
        %v637 = vpop.f32.mrf.mxu0
        %v638 = vadd.f32 %v591, %v637
        %639 = vmatmul.f32.gmra.mxu0 %v482
        %v640 = vpop.f32.mrf.mxu0
        %v641 = vadd.f32 %v594, %v640
        %642 = vmatmul.f32.gmra.mxu0 %v484
        %v643 = vpop.f32.mrf.mxu0
        %v644 = vadd.f32 %v597, %v643
        %645 = vmatmul.f32.gmra.mxu0 %v486
        %v646 = vpop.f32.mrf.mxu0
        %v647 = vadd.f32 %v600, %v646
        %648 = vmatmul.f32.gmra.mxu0 %v488
        %v649 = vpop.f32.mrf.mxu0
        %v650 = vadd.f32 %v603, %v649
        %651 = vmatmul.f32.gmra.mxu0 %v490
        %v652 = vpop.f32.mrf.mxu0
        %v653 = vadd.f32 %v606, %v652
        %654 = vdwg.mxu0
        %655 = vmatpush.msra.mxu0 %v522
        %656 = vmatpush.msra.mxu0 %v520
        %657 = vmatpush.msra.mxu0 %v518
        %658 = vmatpush.msra.mxu0 %v516
        %659 = vmatpush.msra.mxu0 %v514
        %660 = vmatpush.msra.mxu0 %v512
        %661 = vmatpush.msra.mxu0 %v510
        %662 = vmatpush.msra.mxu0 %v508
        %663 = vmatpush.msra.mxu0 %v506
        %664 = vmatpush.msra.mxu0 %v504
        %665 = vmatpush.msra.mxu0 %v502
        %666 = vmatpush.msra.mxu0 %v500
        %667 = vmatpush.msra.mxu0 %v498
        %668 = vmatpush.msra.mxu0 %v496
        %669 = vmatpush.msra.mxu0 %v494
        %670 = vmatpush.msra.mxu0 %v492
        %671 = vmatmul.f32.gmra.mxu0 %v471
        %v672 = vpop.f32.mrf.mxu0
        %v673 = vadd.f32 %v558, %v672
        %674 = vmatmul.f32.gmra.mxu0 %v473
        %v675 = vpop.f32.mrf.mxu0
        %v676 = vadd.f32 %v558, %v675
        %677 = vmatmul.f32.gmra.mxu0 %v475
        %v678 = vpop.f32.mrf.mxu0
        %v679 = vadd.f32 %v558, %v678
        %680 = vmatmul.f32.gmra.mxu0 %v477
        %v681 = vpop.f32.mrf.mxu0
        %v682 = vadd.f32 %v558, %v681
        %683 = vmatmul.f32.gmra.mxu0 %v479
        %v684 = vpop.f32.mrf.mxu0
        %v685 = vadd.f32 %v558, %v684
        %686 = vmatmul.f32.gmra.mxu0 %v481
        %v687 = vpop.f32.mrf.mxu0
        %v688 = vadd.f32 %v558, %v687
        %689 = vmatmul.f32.gmra.mxu0 %v483
        %v690 = vpop.f32.mrf.mxu0
        %v691 = vadd.f32 %v558, %v690
        %692 = vmatmul.f32.gmra.mxu0 %v485
        %v693 = vpop.f32.mrf.mxu0
        %v694 = vadd.f32 %v558, %v693
        %695 = vmatmul.f32.gmra.mxu0 %v487
        %v696 = vpop.f32.mrf.mxu0
        %v697 = vadd.f32 %v558, %v696
        %698 = vmatmul.f32.gmra.mxu0 %v489
        %v699 = vpop.f32.mrf.mxu0
        %v700 = vadd.f32 %v558, %v699
        %701 = vdwg.mxu0
        %702 = vmatpush.msra.mxu0 %v554
        %703 = vmatpush.msra.mxu0 %v552
        %704 = vmatpush.msra.mxu0 %v550
        %705 = vmatpush.msra.mxu0 %v548
        %706 = vmatpush.msra.mxu0 %v546
        %707 = vmatpush.msra.mxu0 %v544
        %708 = vmatpush.msra.mxu0 %v542
        %709 = vmatpush.msra.mxu0 %v540
        %710 = vmatpush.msra.mxu0 %v538
        %711 = vmatpush.msra.mxu0 %v536
        %712 = vmatpush.msra.mxu0 %v534
        %713 = vmatpush.msra.mxu0 %v532
        %714 = vmatpush.msra.mxu0 %v530
        %715 = vmatpush.msra.mxu0 %v528
        %716 = vmatpush.msra.mxu0 %v526
        %717 = vmatpush.msra.mxu0 %v524
        %718 = vmatmul.f32.gmra.mxu0 %v472
        %v719 = vpop.f32.mrf.mxu0
        %v720 = vadd.f32 %v673, %v719
        %721 = vmatmul.f32.gmra.mxu0 %v474
        %v722 = vpop.f32.mrf.mxu0
        %v723 = vadd.f32 %v676, %v722
        %724 = vmatmul.f32.gmra.mxu0 %v476
        %v725 = vpop.f32.mrf.mxu0
        %v726 = vadd.f32 %v679, %v725
        %727 = vmatmul.f32.gmra.mxu0 %v478
        %v728 = vpop.f32.mrf.mxu0
        %v729 = vadd.f32 %v682, %v728
        %730 = vmatmul.f32.gmra.mxu0 %v480
        %v731 = vpop.f32.mrf.mxu0
        %v732 = vadd.f32 %v685, %v731
        %733 = vmatmul.f32.gmra.mxu0 %v482
        %v734 = vpop.f32.mrf.mxu0
        %v735 = vadd.f32 %v688, %v734
        %736 = vmatmul.f32.gmra.mxu0 %v484
        %v737 = vpop.f32.mrf.mxu0
        %v738 = vadd.f32 %v691, %v737
        %739 = vmatmul.f32.gmra.mxu0 %v486
        %v740 = vpop.f32.mrf.mxu0
        %v741 = vadd.f32 %v694, %v740
        %742 = vmatmul.f32.gmra.mxu0 %v488
        %v743 = vpop.f32.mrf.mxu0
        %v744 = vadd.f32 %v697, %v743
        %745 = vmatmul.f32.gmra.mxu0 %v490
        %v746 = vpop.f32.mrf.mxu0
        %v747 = vadd.f32 %v700, %v746
        %748 = vdwg.mxu0
        %v749 = vmax.f32 %v626, 0.0
        %v750 = vmax.f32 %v720, 0.0
        %v751 = vmax.f32 %v629, 0.0
        %v752 = vmax.f32 %v723, 0.0
        %v753 = vmax.f32 %v632, 0.0
        %v754 = vmax.f32 %v726, 0.0
        %v755 = vmax.f32 %v635, 0.0
        %v756 = vmax.f32 %v729, 0.0
        %v757 = vmax.f32 %v638, 0.0
        %v758 = vmax.f32 %v732, 0.0
        %v759 = vmax.f32 %v641, 0.0
        %v760 = vmax.f32 %v735, 0.0
        %v761 = vmax.f32 %v644, 0.0
        %v762 = vmax.f32 %v738, 0.0
        %v763 = vmax.f32 %v647, 0.0
        %v764 = vmax.f32 %v741, 0.0
        %v765 = vmax.f32 %v650, 0.0
        %v766 = vmax.f32 %v744, 0.0
        %v767 = vmax.f32 %v653, 0.0
        %v768 = vmax.f32 %v747, 0.0
        %v769 = vld [vmem:[%s5] sm:$0xff]
        %v770 = vld [vmem:[%s5 + $0x8] sm:$0xff]
        %v771 = vld [vmem:[%s5 + $0x10] sm:$0xff]
        %v772 = vld [vmem:[%s5 + $0x18] sm:$0xff]
        %v773 = vld [vmem:[%s5 + $0x20] sm:$0xff]
        %v774 = vld [vmem:[%s5 + $0x28] sm:$0xff]
        %v775 = vld [vmem:[%s5 + $0x30] sm:$0xff]
        %v776 = vld [vmem:[%s5 + $0x38] sm:$0xff]
        %v777 = vld [vmem:[%s5 + $0x40] sm:$0xff]
        %v778 = vld [vmem:[%s5 + $0x48] sm:$0xff]
        %v779 = vld [vmem:[%s5 + $0x50] sm:$0xff]
        %v780 = vld [vmem:[%s5 + $0x58] sm:$0xff]
        %v781 = vld [vmem:[%s5 + $0x60] sm:$0xff]
        %v782 = vld [vmem:[%s5 + $0x68] sm:$0xff]
        %v783 = vld [vmem:[%s5 + $0x70] sm:$0xff]
        %v784 = vld [vmem:[%s5 + $0x78] sm:$0xff]
        %v785 = vld [vmem:[%s5 + $0x80] sm:$0xff]
        %v786 = vld [vmem:[%s5 + $0x88] sm:$0xff]
        %v787 = vld [vmem:[%s5 + $0x90] sm:$0xff]
        %v788 = vld [vmem:[%s5 + $0x98] sm:$0xff]
        %v789 = vld [vmem:[%s5 + $0xa0] sm:$0xff]
        %v790 = vld [vmem:[%s5 + $0xa8] sm:$0xff]
        %v791 = vld [vmem:[%s5 + $0xb0] sm:$0xff]
        %v792 = vld [vmem:[%s5 + $0xb8] sm:$0xff]
        %v793 = vld [vmem:[%s5 + $0xc0] sm:$0xff]
        %v794 = vld [vmem:[%s5 + $0xc8] sm:$0xff]
        %v795 = vld [vmem:[%s5 + $0xd0] sm:$0xff]
        %v796 = vld [vmem:[%s5 + $0xd8] sm:$0xff]
        %v797 = vld [vmem:[%s5 + $0xe0] sm:$0xff]
        %v798 = vld [vmem:[%s5 + $0xe8] sm:$0xff]
        %v799 = vld [vmem:[%s5 + $0xf0] sm:$0xff]
        %v800 = vld [vmem:[%s5 + $0xf8] sm:$0xff]
        %v801 = vld [vmem:[%s6] sm:$0x1]
        %v803 = vperm.slane %v801, 0
        %805 = vmatpush.msra.mxu0 %v784
        %806 = vmatpush.msra.mxu0 %v783
        %807 = vmatpush.msra.mxu0 %v782
        %808 = vmatpush.msra.mxu0 %v781
        %809 = vmatpush.msra.mxu0 %v780
        %810 = vmatpush.msra.mxu0 %v779
        %811 = vmatpush.msra.mxu0 %v778
        %812 = vmatpush.msra.mxu0 %v777
        %813 = vmatpush.msra.mxu0 %v776
        %814 = vmatpush.msra.mxu0 %v775
        %815 = vmatpush.msra.mxu0 %v774
        %816 = vmatpush.msra.mxu0 %v773
        %817 = vmatpush.msra.mxu0 %v772
        %818 = vmatpush.msra.mxu0 %v771
        %819 = vmatpush.msra.mxu0 %v770
        %820 = vmatpush.msra.mxu0 %v769
        %821 = vmatmul.f32.gmra.mxu0 %v749
        %v822 = vpop.f32.mrf.mxu0
        %v823 = vadd.f32 %v803, %v822
        %824 = vmatmul.f32.gmra.mxu0 %v751
        %v825 = vpop.f32.mrf.mxu0
        %v826 = vadd.f32 %v803, %v825
        %827 = vmatmul.f32.gmra.mxu0 %v753
        %v828 = vpop.f32.mrf.mxu0
        %v829 = vadd.f32 %v803, %v828
        %830 = vmatmul.f32.gmra.mxu0 %v755
        %v831 = vpop.f32.mrf.mxu0
        %v832 = vadd.f32 %v803, %v831
        %833 = vmatmul.f32.gmra.mxu0 %v757
        %v834 = vpop.f32.mrf.mxu0
        %v835 = vadd.f32 %v803, %v834
        %836 = vmatmul.f32.gmra.mxu0 %v759
        %v837 = vpop.f32.mrf.mxu0
        %v838 = vadd.f32 %v803, %v837
        %839 = vmatmul.f32.gmra.mxu0 %v761
        %v840 = vpop.f32.mrf.mxu0
        %v841 = vadd.f32 %v803, %v840
        %842 = vmatmul.f32.gmra.mxu0 %v763
        %v843 = vpop.f32.mrf.mxu0
        %v844 = vadd.f32 %v803, %v843
        %845 = vmatmul.f32.gmra.mxu0 %v765
        %v846 = vpop.f32.mrf.mxu0
        %v847 = vadd.f32 %v803, %v846
        %848 = vmatmul.f32.gmra.mxu0 %v767
        %v849 = vpop.f32.mrf.mxu0
        %v850 = vadd.f32 %v803, %v849
        %851 = vdwg.mxu0
        %852 = vmatpush.msra.mxu0 %v800
        %853 = vmatpush.msra.mxu0 %v799
        %854 = vmatpush.msra.mxu0 %v798
        %855 = vmatpush.msra.mxu0 %v797
        %856 = vmatpush.msra.mxu0 %v796
        %857 = vmatpush.msra.mxu0 %v795
        %858 = vmatpush.msra.mxu0 %v794
        %859 = vmatpush.msra.mxu0 %v793
        %860 = vmatpush.msra.mxu0 %v792
        %861 = vmatpush.msra.mxu0 %v791
        %862 = vmatpush.msra.mxu0 %v790
        %863 = vmatpush.msra.mxu0 %v789
        %864 = vmatpush.msra.mxu0 %v788
        %865 = vmatpush.msra.mxu0 %v787
        %866 = vmatpush.msra.mxu0 %v786
        %867 = vmatpush.msra.mxu0 %v785
        %868 = vmatmul.f32.gmra.mxu0 %v750
        %v869 = vpop.f32.mrf.mxu0
        %v870 = vadd.f32 %v823, %v869
        %871 = vmatmul.f32.gmra.mxu0 %v752
        %v872 = vpop.f32.mrf.mxu0
        %v873 = vadd.f32 %v826, %v872
        %874 = vmatmul.f32.gmra.mxu0 %v754
        %v875 = vpop.f32.mrf.mxu0
        %v876 = vadd.f32 %v829, %v875
        %877 = vmatmul.f32.gmra.mxu0 %v756
        %v878 = vpop.f32.mrf.mxu0
        %v879 = vadd.f32 %v832, %v878
        %880 = vmatmul.f32.gmra.mxu0 %v758
        %v881 = vpop.f32.mrf.mxu0
        %v882 = vadd.f32 %v835, %v881
        %883 = vmatmul.f32.gmra.mxu0 %v760
        %v884 = vpop.f32.mrf.mxu0
        %v885 = vadd.f32 %v838, %v884
        %886 = vmatmul.f32.gmra.mxu0 %v762
        %v887 = vpop.f32.mrf.mxu0
        %v888 = vadd.f32 %v841, %v887
        %889 = vmatmul.f32.gmra.mxu0 %v764
        %v890 = vpop.f32.mrf.mxu0
        %v891 = vadd.f32 %v844, %v890
        %892 = vmatmul.f32.gmra.mxu0 %v766
        %v893 = vpop.f32.mrf.mxu0
        %v894 = vadd.f32 %v847, %v893
        %895 = vmatmul.f32.gmra.mxu0 %v768
        %v896 = vpop.f32.mrf.mxu0
        %v897 = vadd.f32 %v850, %v896
        %898 = vdwg.mxu0
        %vm899 = vcmask 64512
        %900 = vst.msk [vmem:[%s318] sm:$0xff] %vm899, %v870
        %901 = vst.msk [vmem:[%s318 + $0x8] sm:$0xff] %vm899, %v873
        %902 = vst.msk [vmem:[%s318 + $0x10] sm:$0xff] %vm899, %v876
        %903 = vst.msk [vmem:[%s318 + $0x18] sm:$0xff] %vm899, %v879
        %904 = vst.msk [vmem:[%s318 + $0x20] sm:$0xff] %vm899, %v882
        %905 = vst.msk [vmem:[%s318 + $0x28] sm:$0xff] %vm899, %v885
        %906 = vst.msk [vmem:[%s318 + $0x30] sm:$0xff] %vm899, %v888
        %907 = vst.msk [vmem:[%s318 + $0x38] sm:$0xff] %vm899, %v891
        %908 = vst.msk [vmem:[%s318 + $0x40] sm:$0xff] %vm899, %v894
        %909 = vst.msk [vmem:[%s318 + $0x48] sm:$0xff] %vm899, %v897
        %s910 = sand.u32 %s182, 1
        %s911 = sand.u32 %s182, 1
        %s912 = smul.addr %s911, 80
        %s913 = scalar_lea.vmem [#allocation6], %s912
        // Predicated region
        $region57: #{tpu_custom_call.1} parent=47 // pred_check
          %p914 = pneg %p192
        $region58: #{tpu_custom_call.1} parent=47 // pred_check_branch
          %916 = sbr.rel (%p914) target = $region60
        $region59: #{tpu_custom_call.1} parent=47 // pred_region
          %s917 = smul.u32 10, %s22
          %s918 = ssub.s32 19, %s917
          %p919 = scmp.lt.s32.totalorder %s918, 10
          %s920 = scalar_select %p919, %s918, 10
          %s921 = smul.u32 8, %s920
          %p922 = scmp.ne.s32.totalorder 0, %s921
          %s923 = smul.addr %s917, 8
          %s924 = scalar_lea.vmem %s7, %s923
          // Predicated region
          $region61: #{tpu_custom_call.1} parent=59 // pred_check
            %p925 = pneg %p922
          $region62: #{tpu_custom_call.1} parent=59 // pred_check_branch
            %927 = sbr.rel (%p925) target = $region64
          $region63: #{tpu_custom_call.1} parent=59 // pred_region
            // Predicated region
            $region65: #{tpu_custom_call.1} parent=63 // pred_check
              _
            $region66: #{tpu_custom_call.1} parent=63 // pred_check_branch
              %929 = sbr.rel (0) target = $region68
            $region67: #{tpu_custom_call.1} parent=63 // pred_region
              // Predicated region
              $region87: #{tpu_custom_call.1} parent=67 // pred_check
                _
              $region88: #{tpu_custom_call.1} parent=67 // pred_check_branch
                %998 = sbr.rel (0) target = $region90
              $region89: #{tpu_custom_call.1} parent=67 // pred_region
                %s999 = sdiv.u32.pop %s920, 10
                %s1000 = srem.u32.pop %s920, 10
                // While loop
                $region91: #{tpu_custom_call.1} parent=89 // loop_pre_header
                  _
                $region92: #{tpu_custom_call.1} parent=89 // loop_header
                  %s1002 = sphi 0, %s1004
                  %p1003 = scmp.ge.s32.totalorder %s1002, %s999
                  %s1007 = sphi 0, %s1032
                  %s1008 = sphi %s913, %s1035
                  %s1009 = sphi %s924, %s1036
                $region93: #{tpu_custom_call.1} parent=89 // loop_header_branch
                  %1006 = sbr.rel (%p1003) target = $region97
                $region94: #{tpu_custom_call.1} parent=89 // loop_body
                  %v1010 = vld [vmem:[%s1008] sm:$0xff]
                  %1011 = vst [vmem:[%s1009] sm:$0xff] %v1010
                  %v1012 = vld [vmem:[%s1008 + $0x8] sm:$0xff]
                  %1013 = vst [vmem:[%s1009 + $0x8] sm:$0xff] %v1012
                  %v1014 = vld [vmem:[%s1008 + $0x10] sm:$0xff]
                  %1015 = vst [vmem:[%s1009 + $0x10] sm:$0xff] %v1014
                  %v1016 = vld [vmem:[%s1008 + $0x18] sm:$0xff]
                  %1017 = vst [vmem:[%s1009 + $0x18] sm:$0xff] %v1016
                  %v1018 = vld [vmem:[%s1008 + $0x20] sm:$0xff]
                  %1019 = vst [vmem:[%s1009 + $0x20] sm:$0xff] %v1018
                  %v1020 = vld [vmem:[%s1008 + $0x28] sm:$0xff]
                  %1021 = vst [vmem:[%s1009 + $0x28] sm:$0xff] %v1020
                  %v1022 = vld [vmem:[%s1008 + $0x30] sm:$0xff]
                  %1023 = vst [vmem:[%s1009 + $0x30] sm:$0xff] %v1022
                  %v1024 = vld [vmem:[%s1008 + $0x38] sm:$0xff]
                  %1025 = vst [vmem:[%s1009 + $0x38] sm:$0xff] %v1024
                  %v1026 = vld [vmem:[%s1008 + $0x40] sm:$0xff]
                  %1027 = vst [vmem:[%s1009 + $0x40] sm:$0xff] %v1026
                  %v1028 = vld [vmem:[%s1008 + $0x48] sm:$0xff]
                  %1029 = vst [vmem:[%s1009 + $0x48] sm:$0xff] %v1028
                  %s1030 = sadd.s32 1, %s1007
                  %p1031 = scmp.ge.s32.totalorder %s1030, %s999
                  %s1032 = scalar_select %p1031, 0, %s1030
                  %s1033 = smul.u32 %s1032, 80
                  %s1034 = smul.u32 %s1032, 80
                  %s1035 = scalar_lea.vmem %s913, %s1033 [#allocation6]
                  %s1036 = scalar_lea.vmem %s924, %s1034
                $region95: #{tpu_custom_call.1} parent=89 // loop_footer
                  %s1004 = sadd.s32 %s1002, 1
                $region96: #{tpu_custom_call.1} parent=89 // loop_footer_branch
                  %1001 = sbr.rel target = $region92
                $region97: #{tpu_custom_call.1} parent=89 // loop_exit
                  _
                %s1037 = sdiv.u32.pop %s920, 10
                %s1038 = srem.u32.pop %s920, 10
                %s1039 = smul.u32 %s1037, 10
                %s1040 = smul.u32 8, %s1039
                %s1041 = scalar_lea.vmem %s913, %s1040 [#allocation6]
                %s1042 = smul.u32 8, %s1039
                %s1043 = scalar_lea.vmem %s924, %s1042
                // While loop
                $region98: #{tpu_custom_call.1} parent=89 // loop_pre_header
                  _
                $region99: #{tpu_custom_call.1} parent=89 // loop_header
                  %s1045 = sphi 0, %s1047
                  %p1046 = scmp.ge.s32.totalorder %s1045, %s1038
                  %s1050 = sphi 0, %s1057
                  %s1051 = sphi %s1041, %s1060
                  %s1052 = sphi %s1043, %s1061
                $region100: #{tpu_custom_call.1} parent=89 // loop_header_branch
                  %1049 = sbr.rel (%p1046) target = $region104
                $region101: #{tpu_custom_call.1} parent=89 // loop_body
                  %v1053 = vld [vmem:[%s1051] sm:$0xff]
                  %1054 = vst [vmem:[%s1052] sm:$0xff] %v1053
                  %s1055 = sadd.s32 1, %s1050
                  %p1056 = scmp.ge.s32.totalorder %s1055, %s1038
                  %s1057 = scalar_select %p1056, 0, %s1055
                  %s1058 = smul.u32 %s1057, 8
                  %s1059 = smul.u32 %s1057, 8
                  %s1060 = scalar_lea.vmem %s1041, %s1058 [#allocation6]
                  %s1061 = scalar_lea.vmem %s1043, %s1059
                $region102: #{tpu_custom_call.1} parent=89 // loop_footer
                  %s1047 = sadd.s32 %s1045, 1
                $region103: #{tpu_custom_call.1} parent=89 // loop_footer_branch
                  %1044 = sbr.rel target = $region99
                $region104: #{tpu_custom_call.1} parent=89 // loop_exit
                  _
              $region90: #{tpu_custom_call.1} parent=67 // pred_fallthru
                _
              // Predicated region
              $region105: #{tpu_custom_call.1} parent=67 // pred_check
                _
              $region106: #{tpu_custom_call.1} parent=67 // pred_check_branch
                %1063 = sbr.rel target = $region108
              $region107: #{tpu_custom_call.1} parent=67 // pred_region
                _
              $region108: #{tpu_custom_call.1} parent=67 // pred_fallthru
                _
            $region68: #{tpu_custom_call.1} parent=63 // pred_fallthru
              _
            // Predicated region
            $region69: #{tpu_custom_call.1} parent=63 // pred_check
              _
            $region70: #{tpu_custom_call.1} parent=63 // pred_check_branch
              %931 = sbr.rel target = $region72
            $region71: #{tpu_custom_call.1} parent=63 // pred_region
              %s933 = ssub.s32 256, 1
              %s934 = sdiv.u32.pop %s920, 10
              %s935 = srem.u32.pop %s920, 10
              // While loop
              $region73: #{tpu_custom_call.1} parent=71 // loop_pre_header
                _
              $region74: #{tpu_custom_call.1} parent=71 // loop_header
                %s937 = sphi 0, %s939
                %p938 = scmp.ge.s32.totalorder %s937, %s934
                %s942 = sphi 0, %s967
                %s943 = sphi %s913, %s970
                %s944 = sphi %s924, %s971
              $region75: #{tpu_custom_call.1} parent=71 // loop_header_branch
                %941 = sbr.rel (%p938) target = $region79
              $region76: #{tpu_custom_call.1} parent=71 // loop_body
                %v945 = vld [vmem:[%s943] sm:%s933]
                %946 = vst [vmem:[%s944] sm:%s933] %v945
                %v947 = vld [vmem:[%s943 + $0x8] sm:%s933]
                %948 = vst [vmem:[%s944 + $0x8] sm:%s933] %v947
                %v949 = vld [vmem:[%s943 + $0x10] sm:%s933]
                %950 = vst [vmem:[%s944 + $0x10] sm:%s933] %v949
                %v951 = vld [vmem:[%s943 + $0x18] sm:%s933]
                %952 = vst [vmem:[%s944 + $0x18] sm:%s933] %v951
                %v953 = vld [vmem:[%s943 + $0x20] sm:%s933]
                %954 = vst [vmem:[%s944 + $0x20] sm:%s933] %v953
                %v955 = vld [vmem:[%s943 + $0x28] sm:%s933]
                %956 = vst [vmem:[%s944 + $0x28] sm:%s933] %v955
                %v957 = vld [vmem:[%s943 + $0x30] sm:%s933]
                %958 = vst [vmem:[%s944 + $0x30] sm:%s933] %v957
                %v959 = vld [vmem:[%s943 + $0x38] sm:%s933]
                %960 = vst [vmem:[%s944 + $0x38] sm:%s933] %v959
                %v961 = vld [vmem:[%s943 + $0x40] sm:%s933]
                %962 = vst [vmem:[%s944 + $0x40] sm:%s933] %v961
                %v963 = vld [vmem:[%s943 + $0x48] sm:%s933]
                %964 = vst [vmem:[%s944 + $0x48] sm:%s933] %v963
                %s965 = sadd.s32 1, %s942
                %p966 = scmp.ge.s32.totalorder %s965, %s934
                %s967 = scalar_select %p966, 0, %s965
                %s968 = smul.u32 %s967, 80
                %s969 = smul.u32 %s967, 80
                %s970 = scalar_lea.vmem %s913, %s968 [#allocation6]
                %s971 = scalar_lea.vmem %s924, %s969
              $region77: #{tpu_custom_call.1} parent=71 // loop_footer
                %s939 = sadd.s32 %s937, 1
              $region78: #{tpu_custom_call.1} parent=71 // loop_footer_branch
                %936 = sbr.rel target = $region74
              $region79: #{tpu_custom_call.1} parent=71 // loop_exit
                _
              %s972 = sdiv.u32.pop %s920, 10
              %s973 = srem.u32.pop %s920, 10
              %s974 = smul.u32 %s972, 10
              %s975 = smul.u32 8, %s974
              %s976 = scalar_lea.vmem %s913, %s975 [#allocation6]
              %s977 = smul.u32 8, %s974
              %s978 = scalar_lea.vmem %s924, %s977
              // While loop
              $region80: #{tpu_custom_call.1} parent=71 // loop_pre_header
                _
              $region81: #{tpu_custom_call.1} parent=71 // loop_header
                %s980 = sphi 0, %s982
                %p981 = scmp.ge.s32.totalorder %s980, %s973
                %s985 = sphi 0, %s992
                %s986 = sphi %s976, %s995
                %s987 = sphi %s978, %s996
              $region82: #{tpu_custom_call.1} parent=71 // loop_header_branch
                %984 = sbr.rel (%p981) target = $region86
              $region83: #{tpu_custom_call.1} parent=71 // loop_body
                %v988 = vld [vmem:[%s986] sm:%s933]
                %989 = vst [vmem:[%s987] sm:%s933] %v988
                %s990 = sadd.s32 1, %s985
                %p991 = scmp.ge.s32.totalorder %s990, %s973
                %s992 = scalar_select %p991, 0, %s990
                %s993 = smul.u32 %s992, 8
                %s994 = smul.u32 %s992, 8
                %s995 = scalar_lea.vmem %s976, %s993 [#allocation6]
                %s996 = scalar_lea.vmem %s978, %s994
              $region84: #{tpu_custom_call.1} parent=71 // loop_footer
                %s982 = sadd.s32 %s980, 1
              $region85: #{tpu_custom_call.1} parent=71 // loop_footer_branch
                %979 = sbr.rel target = $region81
              $region86: #{tpu_custom_call.1} parent=71 // loop_exit
                _
            $region72: #{tpu_custom_call.1} parent=63 // pred_fallthru
              _
          $region64: #{tpu_custom_call.1} parent=59 // pred_fallthru
            _
          %1064 = vnop
        $region60: #{tpu_custom_call.1} parent=47 // pred_fallthru
          _
      $region48: #{tpu_custom_call.1} parent=5 // pred_fallthru
        _
      %p1065 = scmp.le.s32.totalorder 2, %s17
      // Predicated region
      $region109: #{tpu_custom_call.1} parent=5 // pred_check
        %p1066 = pneg %p1065
      $region110: #{tpu_custom_call.1} parent=5 // pred_check_branch
        %1068 = sbr.rel (%p1066) target = $region112
      $region111: #{tpu_custom_call.1} parent=5 // pred_region
        %s1069 = ssub.s32 %s17, 2
        // Predicated region
        $region113: #{tpu_custom_call.1} parent=111 // pred_check
          %p1070 = pneg %p198
        $region114: #{tpu_custom_call.1} parent=111 // pred_check_branch
          %1072 = sbr.rel (%p1070) target = $region116
        $region115: #{tpu_custom_call.1} parent=111 // pred_region
          %s1073 = sand.u32 %s183, 1
          %s1074 = sand.u32 %s183, 1
          %s1075 = smul.addr %s1074, 80
          %s1076 = scalar_lea.vmem [#allocation6], %s1075
        $region116: #{tpu_custom_call.1} parent=111 // pred_fallthru
          _
      $region112: #{tpu_custom_call.1} parent=5 // pred_fallthru
        _
    $region6: #{tpu_custom_call.1} parent=1 // loop_footer
      %s21 = sadd.s32 1, %s17
    $region7: #{tpu_custom_call.1} parent=1 // loop_footer_branch
      %16 = sbr.rel target = $region3
    $region8: #{tpu_custom_call.1} parent=1 // loop_exit
      _
    %1077 = vsyncpa [#allocation3], 1
    %s1078 = scalar_lea.sflag [#allocation3], 1
    %1079 = vsyncpa %s1078, 1
    %1080 = vsyncpa [#allocation5], 1

</llo_original>
